<compile_context>
chip_gen: v5e
topology: v5e:2x2
jax: 0.10.0
libtpu: 0.0.40
codegen_flags: <defaults>
</compile_context>

<pallas_src>
import jax
import jax.numpy as jnp
from jax.experimental import pallas as pl
from jax.experimental.pallas import tpu as pltpu


def _round_up(n, m):
    return ((n + m - 1) // m) * m


def mlp_classifier_forward(x, w1, b1, w2, b2):
    """Forward pass of MLPClassifier.

    Params are in PyTorch-native layout:
      w1: [hidden, input_size], b1: [hidden], w2: [output, hidden], b2: [output].
    x: [batch, ...] (flattened with start_dim=1, like nn.Flatten).
    Returns [batch, output] float32 probabilities.
    """
    batch = x.shape[0]
    x_flat = x.reshape(batch, -1)
    in_size = x_flat.shape[1]
    hidden = w1.shape[0]
    out_size = w2.shape[0]

    # Lane-dense padded sizes.
    k_pad = _round_up(in_size, 128)
    h_pad = _round_up(hidden, 128)
    out_pad = _round_up(out_size, 128)
    bias_cols = max(h_pad, out_pad)

    # Batch tiling: largest sensible tile; pad batch rows to a tile multiple.
    tile_b = 512 if batch >= 512 else _round_up(batch, 8)
    bp = _round_up(batch, tile_b)

    # --- parameter / input prep (bf16 MXU operands, f32 biases) -----------------
    x_k = jnp.zeros((bp, k_pad), jnp.bfloat16).at[:batch, :in_size].set(
        x_flat.astype(jnp.bfloat16))
    w1_k = jnp.zeros((h_pad, k_pad), jnp.bfloat16).at[:hidden, :in_size].set(
        w1.astype(jnp.bfloat16))                               # [h_pad, k_pad] lane-dense
    w2_k = jnp.zeros((h_pad, out_pad), jnp.bfloat16).at[:hidden, :out_size].set(
        w2.T.astype(jnp.bfloat16))                             # [h_pad, out_pad]
    b_k = jnp.zeros((2, bias_cols), jnp.float32)
    b_k = b_k.at[0, :hidden].set(b1.astype(jnp.float32))
    b_k = b_k.at[1, :out_size].set(b2.astype(jnp.float32))

    def kernel(x_ref, w1_ref, b_ref, w2_ref, o_ref):
        # h = relu(x @ W1^T + b1)   (contract last dims: x[tb,K] . w1[H,K] -> [tb,H])
        h = jax.lax.dot_general(
            x_ref[...], w1_ref[...], (((1,), (1,)), ((), ())),
            preferred_element_type=jnp.float32)
        b = b_ref[...]
        h = jnp.maximum(h + b[0:1, :h_pad], 0.0)
        # y = sigmoid(h @ W2 + b2)  (deliberate bf16 cast of h; f32 accumulator)
        z = jnp.dot(h.astype(jnp.bfloat16), w2_ref[...],
                    preferred_element_type=jnp.float32)
        o_ref[...] = jax.nn.sigmoid(z + b[1:2, :out_pad])

    out = pl.pallas_call(
        kernel,
        out_shape=jax.ShapeDtypeStruct((bp, out_pad), jnp.float32),
        grid=(bp // tile_b,),
        in_specs=[
            pl.BlockSpec((tile_b, k_pad), lambda i: (i, 0)),   # x tiles stream
            pl.BlockSpec((h_pad, k_pad),  lambda i: (0, 0)),   # W1 resident
            pl.BlockSpec((2, bias_cols),  lambda i: (0, 0)),   # packed biases resident
            pl.BlockSpec((h_pad, out_pad), lambda i: (0, 0)),  # W2 resident
        ],
        out_specs=pl.BlockSpec((tile_b, out_pad), lambda i: (i, 0)),
        compiler_params=pltpu.CompilerParams(
            dimension_semantics=("parallel",)),                # megacore on v7x
    )(x_k, w1_k, b_k, w2_k)

    return out[:batch, :out_size]


def init_params(key, input_size, hidden_size, output_size):
    """nn.Linear-style U(-1/sqrt(fan_in), 1/sqrt(fan_in)) init, PyTorch-native layout."""
    k1, k2, k3, k4 = jax.random.split(key, 4)
    bound1 = 1.0 / float(input_size) ** 0.5
    bound2 = 1.0 / float(hidden_size) ** 0.5
    w1 = jax.random.uniform(k1, (hidden_size, input_size), jnp.float32, -bound1, bound1)
    b1 = jax.random.uniform(k2, (hidden_size,), jnp.float32, -bound1, bound1)
    w2 = jax.random.uniform(k3, (output_size, hidden_size), jnp.float32, -bound2, bound2)
    b2 = jax.random.uniform(k4, (output_size,), jnp.float32, -bound2, bound2)
    return w1, b1, w2, b2


if __name__ == "__main__":
    key = jax.random.PRNGKey(0)
    kx, kp = jax.random.split(key)

    batch, channels, spatial = 2, 4, 16
    x = jax.random.normal(kx, (batch, channels, spatial, spatial), jnp.float32)

    input_size = channels * spatial * spatial   # 1024
    hidden_size = 32
    output_size = 8
    w1, b1, w2, b2 = init_params(kp, input_size, hidden_size, output_size)

    out = mlp_classifier_forward(x, w1, b1, w2, b2)
    jax.block_until_ready(out)
    assert out.shape == (batch, output_size)

    # Reference 1: same bf16-operand / f32-accumulate math in pure JAX (tight match).
    x_flat = x.reshape(batch, -1)
    xb, w1b, w2b = (a.astype(jnp.bfloat16) for a in (x_flat, w1, w2))
    h_ref = jax.lax.dot_general(xb, w1b, (((1,), (1,)), ((), ())),
                                preferred_element_type=jnp.float32) + b1[None, :]
    h_ref = jnp.maximum(h_ref, 0.0)
    z_ref = jnp.dot(h_ref.astype(jnp.bfloat16), w2b.T,
                    preferred_element_type=jnp.float32) + b2[None, :]
    ref_bf16 = jax.nn.sigmoid(z_ref)
    assert jnp.allclose(out, ref_bf16, atol=1e-3, rtol=1e-3)

    # Reference 2: full-f32 PyTorch-equivalent forward (loose match; bf16 MXU inputs).
    ref_f32 = jax.nn.sigmoid(
        jnp.maximum(x_flat @ w1.T + b1[None, :], 0.0) @ w2.T + b2[None, :])
    assert jnp.allclose(out, ref_f32, atol=5e-2)

    print("KERNEL_OK")
</pallas_src>

<mosaic_0001>
module attributes {stable_mosaic.version = 11 : i64} {
  func.func @kernel(%arg0: i32, %arg1: memref<8x1024xbf16, #tpu.memory_space<vmem>>, %arg2: memref<128x1024xbf16, #tpu.memory_space<vmem>>, %arg3: memref<2x128xf32, #tpu.memory_space<vmem>>, %arg4: memref<128x128xbf16, #tpu.memory_space<vmem>>, %arg5: memref<8x128xf32, #tpu.memory_space<vmem>>) attributes {dimension_semantics = [#tpu.dimension_semantics<parallel>], iteration_bounds = array<i64: 1>, scalar_prefetch = 0 : i64, scratch_operands = 0 : i64, tpu.core_type = #tpu.core_type<tc>, window_params = [{transform_indices = @transform_0, window_bounds = array<i64: 8, 1024>}, {pipeline_mode = #tpu.pipeline_mode<synchronous>, transform_indices = @transform_1, window_bounds = array<i64: 128, 1024>}, {pipeline_mode = #tpu.pipeline_mode<synchronous>, transform_indices = @transform_2, window_bounds = array<i64: 2, 128>}, {pipeline_mode = #tpu.pipeline_mode<synchronous>, transform_indices = @transform_3, window_bounds = array<i64: 128, 128>}, {transform_indices = @transform_4, window_bounds = array<i64: 8, 128>}]} {
    %c0 = arith.constant 0 : index
    %c0_0 = arith.constant 0 : index
    %0 = vector.load %arg1[%c0, %c0_0] : memref<8x1024xbf16, #tpu.memory_space<vmem>>, vector<8x1024xbf16>
    %c0_1 = arith.constant 0 : index
    %c0_2 = arith.constant 0 : index
    %1 = vector.load %arg2[%c0_1, %c0_2] : memref<128x1024xbf16, #tpu.memory_space<vmem>>, vector<128x1024xbf16>
    %cst = arith.constant dense<0.000000e+00> : vector<8x128xf32>
    %2 = tpu.matmul %0, %1, %cst {dimension_numbers = #tpu.dot_dimension_numbers<[1], [1], [0], [0], [0, 0, 1, 0], [], []>} : vector<8x1024xbf16>, vector<128x1024xbf16>, vector<8x128xf32> -> vector<8x128xf32>
    %c0_3 = arith.constant 0 : index
    %c0_4 = arith.constant 0 : index
    %3 = vector.load %arg3[%c0_3, %c0_4] : memref<2x128xf32, #tpu.memory_space<vmem>>, vector<2x128xf32>
    %4 = vector.extract_strided_slice %3 {offsets = [0, 0], sizes = [1, 128], strides = [1, 1]} : vector<2x128xf32> to vector<1x128xf32>
    %5 = vector.broadcast %4 : vector<1x128xf32> to vector<8x128xf32>
    %6 = arith.addf %2, %5 : vector<8x128xf32>
    %cst_5 = arith.constant 0.000000e+00 : f32
    %7 = vector.broadcast %cst_5 : f32 to vector<8x128xf32>
    %8 = arith.maximumf %6, %7 : vector<8x128xf32>
    %9 = arith.truncf %8 : vector<8x128xf32> to vector<8x128xbf16>
    %c0_6 = arith.constant 0 : index
    %c0_7 = arith.constant 0 : index
    %10 = vector.load %arg4[%c0_6, %c0_7] : memref<128x128xbf16, #tpu.memory_space<vmem>>, vector<128x128xbf16>
    %cst_8 = arith.constant dense<0.000000e+00> : vector<8x128xf32>
    %11 = tpu.matmul %9, %10, %cst_8 {dimension_numbers = #tpu.dot_dimension_numbers<[1], [0], [0], [1], [0, 0, 1, 1], [], []>} : vector<8x128xbf16>, vector<128x128xbf16>, vector<8x128xf32> -> vector<8x128xf32>
    %12 = vector.extract_strided_slice %3 {offsets = [1, 0], sizes = [1, 128], strides = [1, 1]} : vector<2x128xf32> to vector<1x128xf32>
    %13 = vector.broadcast %12 : vector<1x128xf32> to vector<8x128xf32>
    %14 = arith.addf %11, %13 : vector<8x128xf32>
    %15 = arith.negf %14 : vector<8x128xf32>
    %16 = math.exp %15 : vector<8x128xf32>
    %cst_9 = arith.constant 1.000000e+00 : f32
    %17 = vector.broadcast %cst_9 : f32 to vector<8x128xf32>
    %18 = arith.addf %17, %16 : vector<8x128xf32>
    %19 = arith.divf %17, %18 : vector<8x128xf32>
    %c0_10 = arith.constant 0 : index
    %c0_11 = arith.constant 0 : index
    %20 = vector.load %arg5[%c0_10, %c0_11] : memref<8x128xf32, #tpu.memory_space<vmem>>, vector<8x128xf32>
    tpu.vector_store %arg5[%c0_10, %c0_11], %19 {strides = array<i32>} : memref<8x128xf32, #tpu.memory_space<vmem>>, vector<8x128xf32>,
    return
  }
  func.func @transform_0(%arg0: i32) -> (i32, i32) {
    %c0_i32 = arith.constant 0 : i32
    %c0_i32_0 = arith.constant 0 : i32
    return %arg0, %c0_i32 : i32, i32
  }
  func.func @transform_1(%arg0: i32) -> (i32, i32) {
    %c0_i32 = arith.constant 0 : i32
    %c0_i32_0 = arith.constant 0 : i32
    %c0_i32_1 = arith.constant 0 : i32
    return %c0_i32, %c0_i32_0 : i32, i32
  }
  func.func @transform_2(%arg0: i32) -> (i32, i32) {
    %c0_i32 = arith.constant 0 : i32
    %c0_i32_0 = arith.constant 0 : i32
    %c0_i32_1 = arith.constant 0 : i32
    return %c0_i32, %c0_i32_0 : i32, i32
  }
  func.func @transform_3(%arg0: i32) -> (i32, i32) {
    %c0_i32 = arith.constant 0 : i32
    %c0_i32_0 = arith.constant 0 : i32
    %c0_i32_1 = arith.constant 0 : i32
    return %c0_i32, %c0_i32_0 : i32, i32
  }
  func.func @transform_4(%arg0: i32) -> (i32, i32) {
    %c0_i32 = arith.constant 0 : i32
    %c0_i32_0 = arith.constant 0 : i32
    return %arg0, %c0_i32 : i32, i32
  }
}

</mosaic_0001>

<llo_original>
// kernel: tpu_custom_call.1
$region0: #{tpu_custom_call.1}
  #allocation0 [shape = 'u32[]', space=smem, size = 0x4, offset = 0x4, fixed_abs, tag = 'smem constant byte address 0x4 - core index']
  #allocation1 [shape = 'u32[72,128]{1,0:T(1,128)}', space=vmem, size = 0x9000, scoped, tag = 'internal scratch']
  %s0 = inlined_call_operand.hbm [shape: bf16[8,1024], index: 0, kind: input, shape index: {}]
  %s1 = inlined_call_operand.hbm [shape: bf16[128,1024], index: 1, kind: input, shape index: {}]
  %s2 = inlined_call_operand.hbm [shape: f32[2,128], index: 2, kind: input, shape index: {}]
  %s3 = inlined_call_operand.hbm [shape: bf16[128,128], index: 3, kind: input, shape index: {}]
  %s4 = inlined_call_operand.hbm [shape: f32[8,128], index: 4, kind: output, shape index: {}]
  %s5 = sld [smem:[#allocation0]]
  $region42: #{tpu_custom_call.1} parent=0
    _
  %s7 = ssub.s32 1, %s5
  %s8 = scalar_select 0, %s7, %s5
  $region1: #{tpu_custom_call.1} parent=0
    #allocation2 [shape = 'u8[16384]{0}', space=vmem, size = 0x4000, scoped, tag = 'input window, operand 0, single buffered']
    #allocation3 [shape = 's32[1]{0}', space=sflag, size = 0x4, scoped, tag = 'scoped memory for tpu_custom_call.1']
    #allocation4 [shape = 's32[1]{0}', space=sflag, size = 0x4, scoped, tag = 'scoped memory for tpu_custom_call.1']
    #allocation5 [shape = 'u8[262144]{0}', space=vmem, size = 0x40000, scoped, tag = 'input window, operand 1, single buffered']
    #allocation6 [shape = 's32[1]{0}', space=sflag, size = 0x4, scoped, tag = 'scoped memory for tpu_custom_call.1']
    #allocation7 [shape = 'u8[1024]{0}', space=vmem, size = 0x400, scoped, tag = 'input window, operand 2, single buffered']
    #allocation8 [shape = 'u8[32768]{0}', space=vmem, size = 0x8000, scoped, tag = 'input window, operand 3, single buffered']
    #allocation9 [shape = 's32[1]{0}', space=sflag, size = 0x4, scoped, tag = 'scoped memory for tpu_custom_call.1']
    #allocation10 [shape = 'u8[4096]{0}', space=vmem, size = 0x1000, scoped, tag = 'output window, operand 0, single buffered']
    %9 = vsyncpa [#allocation3], 0
    %10 = vsyncpa [#allocation6], 0
    %11 = vsyncpa [#allocation9], 0
    %12 = vsyncpa [#allocation4], 0
    // Predicated region
    $region2: #{tpu_custom_call.1} parent=1 // pred_check
      _
    $region3: #{tpu_custom_call.1} parent=1 // pred_check_branch
      %14 = sbr.rel (0) target = $region5
    $region4: #{tpu_custom_call.1} parent=1 // pred_region
      %16 = vsyncadd [#allocation3], 0
      %s18 = sshll.u32 %s0, 4
      %s19 = int_to_ptr.hbm [resolvable:$true] %s18
      %s20 = sshll.u32 [#allocation2], 4
      %s21 = int_to_ptr.vmem [resolvable:$true] %s20
      %23 = dma.hbm_to_vmem [thread:$0]  %s19, 512, %s21, [#allocation3]
    $region5: #{tpu_custom_call.1} parent=1 // pred_fallthru
      _
    // Predicated region
    $region6: #{tpu_custom_call.1} parent=1 // pred_check
      _
    $region7: #{tpu_custom_call.1} parent=1 // pred_check_branch
      %25 = sbr.rel (0) target = $region9
    $region8: #{tpu_custom_call.1} parent=1 // pred_region
      %27 = vsyncadd [#allocation6], 0
      %s28 = sshll.u32 %s1, 4
      %s29 = int_to_ptr.hbm [resolvable:$true] %s28
      %s30 = sshll.u32 [#allocation5], 4
      %s31 = int_to_ptr.vmem [resolvable:$true] %s30
      %36 = dma.hbm_to_vmem [thread:$0]  %s29, 8192, %s31, [#allocation6], 512, 512, 32
    $region9: #{tpu_custom_call.1} parent=1 // pred_fallthru
      _
    // Predicated region
    $region10: #{tpu_custom_call.1} parent=1 // pred_check
      _
    $region11: #{tpu_custom_call.1} parent=1 // pred_check_branch
      %38 = sbr.rel (0) target = $region13
    $region12: #{tpu_custom_call.1} parent=1 // pred_region
      %40 = vsyncadd [#allocation6], 0
      %s42 = sshll.u32 %s2, 4
      %s43 = int_to_ptr.hbm [resolvable:$true] %s42
      %s44 = sshll.u32 [#allocation7], 4
      %s45 = int_to_ptr.vmem [resolvable:$true] %s44
      %47 = dma.hbm_to_vmem [thread:$0]  %s43, 32, %s45, [#allocation6]
    $region13: #{tpu_custom_call.1} parent=1 // pred_fallthru
      _
    // Predicated region
    $region14: #{tpu_custom_call.1} parent=1 // pred_check
      _
    $region15: #{tpu_custom_call.1} parent=1 // pred_check_branch
      %49 = sbr.rel (0) target = $region17
    $region16: #{tpu_custom_call.1} parent=1 // pred_region
      %51 = vsyncadd [#allocation9], 0
      %s52 = sshll.u32 %s3, 4
      %s53 = int_to_ptr.hbm [resolvable:$true] %s52
      %s54 = sshll.u32 [#allocation8], 4
      %s55 = int_to_ptr.vmem [resolvable:$true] %s54
      %60 = dma.hbm_to_vmem [thread:$0]  %s53, 1024, %s55, [#allocation9], 64, 64, 4
    $region17: #{tpu_custom_call.1} parent=1 // pred_fallthru
      _
    // Predicated region
    $region18: #{tpu_custom_call.1} parent=1 // pred_check
      _
    $region19: #{tpu_custom_call.1} parent=1 // pred_check_branch
      %62 = sbr.rel (0) target = $region21
    $region20: #{tpu_custom_call.1} parent=1 // pred_region
      %64 = dma.done [#allocation3], 512
    $region21: #{tpu_custom_call.1} parent=1 // pred_fallthru
      _
    // Predicated region
    $region22: #{tpu_custom_call.1} parent=1 // pred_check
      _
    $region23: #{tpu_custom_call.1} parent=1 // pred_check_branch
      %66 = sbr.rel (0) target = $region25
    $region24: #{tpu_custom_call.1} parent=1 // pred_region
      %68 = dma.done [#allocation6], 8192
    $region25: #{tpu_custom_call.1} parent=1 // pred_fallthru
      _
    // Predicated region
    $region26: #{tpu_custom_call.1} parent=1 // pred_check
      _
    $region27: #{tpu_custom_call.1} parent=1 // pred_check_branch
      %70 = sbr.rel (0) target = $region29
    $region28: #{tpu_custom_call.1} parent=1 // pred_region
      %72 = dma.done [#allocation6], 32
    $region29: #{tpu_custom_call.1} parent=1 // pred_fallthru
      _
    // Predicated region
    $region30: #{tpu_custom_call.1} parent=1 // pred_check
      _
    $region31: #{tpu_custom_call.1} parent=1 // pred_check_branch
      %74 = sbr.rel (0) target = $region33
    $region32: #{tpu_custom_call.1} parent=1 // pred_region
      %76 = dma.done [#allocation9], 1024
    $region33: #{tpu_custom_call.1} parent=1 // pred_fallthru
      _
    %v77 = vld [vmem:[#allocation2] sm:$0xff]
    %v78 = vld [vmem:[#allocation2 + $0x8] sm:$0xff]
    %v79 = vld [vmem:[#allocation2 + $0x10] sm:$0xff]
    %v80 = vld [vmem:[#allocation2 + $0x18] sm:$0xff]
    %v81 = vld [vmem:[#allocation5] sm:$0xff]
    %v82 = vld [vmem:[#allocation5 + $0x8] sm:$0xff]
    %v83 = vld [vmem:[#allocation5 + $0x10] sm:$0xff]
    %v84 = vld [vmem:[#allocation5 + $0x18] sm:$0xff]
    %v85 = vld [vmem:[#allocation5 + $0x20] sm:$0xff]
    %v86 = vld [vmem:[#allocation5 + $0x28] sm:$0xff]
    %v87 = vld [vmem:[#allocation5 + $0x30] sm:$0xff]
    %v88 = vld [vmem:[#allocation5 + $0x38] sm:$0xff]
    %v89 = vld [vmem:[#allocation5 + $0x40] sm:$0xff]
    %v90 = vld [vmem:[#allocation5 + $0x48] sm:$0xff]
    %v91 = vld [vmem:[#allocation5 + $0x50] sm:$0xff]
    %v92 = vld [vmem:[#allocation5 + $0x58] sm:$0xff]
    %v93 = vld [vmem:[#allocation5 + $0x60] sm:$0xff]
    %v94 = vld [vmem:[#allocation5 + $0x68] sm:$0xff]
    %v95 = vld [vmem:[#allocation5 + $0x70] sm:$0xff]
    %v96 = vld [vmem:[#allocation5 + $0x78] sm:$0xff]
    %v97 = vld [vmem:[#allocation5 + $0x80] sm:$0xff]
    %v98 = vld [vmem:[#allocation5 + $0x88] sm:$0xff]
    %v99 = vld [vmem:[#allocation5 + $0x90] sm:$0xff]
    %v100 = vld [vmem:[#allocation5 + $0x98] sm:$0xff]
    %v101 = vld [vmem:[#allocation5 + $0xa0] sm:$0xff]
    %v102 = vld [vmem:[#allocation5 + $0xa8] sm:$0xff]
    %v103 = vld [vmem:[#allocation5 + $0xb0] sm:$0xff]
    %v104 = vld [vmem:[#allocation5 + $0xb8] sm:$0xff]
    %v105 = vld [vmem:[#allocation5 + $0xc0] sm:$0xff]
    %v106 = vld [vmem:[#allocation5 + $0xc8] sm:$0xff]
    %v107 = vld [vmem:[#allocation5 + $0xd0] sm:$0xff]
    %v108 = vld [vmem:[#allocation5 + $0xd8] sm:$0xff]
    %v109 = vld [vmem:[#allocation5 + $0xe0] sm:$0xff]
    %v110 = vld [vmem:[#allocation5 + $0xe8] sm:$0xff]
    %v111 = vld [vmem:[#allocation5 + $0xf0] sm:$0xff]
    %v112 = vld [vmem:[#allocation5 + $0xf8] sm:$0xff]
    %v113 = vld [vmem:[#allocation5 + $0x100] sm:$0xff]
    %v114 = vld [vmem:[#allocation5 + $0x108] sm:$0xff]
    %v115 = vld [vmem:[#allocation5 + $0x110] sm:$0xff]
    %v116 = vld [vmem:[#allocation5 + $0x118] sm:$0xff]
    %v117 = vld [vmem:[#allocation5 + $0x120] sm:$0xff]
    %v118 = vld [vmem:[#allocation5 + $0x128] sm:$0xff]
    %v119 = vld [vmem:[#allocation5 + $0x130] sm:$0xff]
    %v120 = vld [vmem:[#allocation5 + $0x138] sm:$0xff]
    %v121 = vld [vmem:[#allocation5 + $0x140] sm:$0xff]
    %v122 = vld [vmem:[#allocation5 + $0x148] sm:$0xff]
    %v123 = vld [vmem:[#allocation5 + $0x150] sm:$0xff]
    %v124 = vld [vmem:[#allocation5 + $0x158] sm:$0xff]
    %v125 = vld [vmem:[#allocation5 + $0x160] sm:$0xff]
    %v126 = vld [vmem:[#allocation5 + $0x168] sm:$0xff]
    %v127 = vld [vmem:[#allocation5 + $0x170] sm:$0xff]
    %v128 = vld [vmem:[#allocation5 + $0x178] sm:$0xff]
    %v129 = vld [vmem:[#allocation5 + $0x180] sm:$0xff]
    %v130 = vld [vmem:[#allocation5 + $0x188] sm:$0xff]
    %v131 = vld [vmem:[#allocation5 + $0x190] sm:$0xff]
    %v132 = vld [vmem:[#allocation5 + $0x198] sm:$0xff]
    %v133 = vld [vmem:[#allocation5 + $0x1a0] sm:$0xff]
    %v134 = vld [vmem:[#allocation5 + $0x1a8] sm:$0xff]
    %v135 = vld [vmem:[#allocation5 + $0x1b0] sm:$0xff]
    %v136 = vld [vmem:[#allocation5 + $0x1b8] sm:$0xff]
    %v137 = vld [vmem:[#allocation5 + $0x1c0] sm:$0xff]
    %v138 = vld [vmem:[#allocation5 + $0x1c8] sm:$0xff]
    %v139 = vld [vmem:[#allocation5 + $0x1d0] sm:$0xff]
    %v140 = vld [vmem:[#allocation5 + $0x1d8] sm:$0xff]
    %v141 = vld [vmem:[#allocation5 + $0x1e0] sm:$0xff]
    %v142 = vld [vmem:[#allocation5 + $0x1e8] sm:$0xff]
    %v143 = vld [vmem:[#allocation5 + $0x1f0] sm:$0xff]
    %v144 = vld [vmem:[#allocation5 + $0x1f8] sm:$0xff]
    %v145 = vld [vmem:[#allocation7] sm:$0x3]
    %v146 = vperm.slane %v145, 0
    %v151 = vunpack.c.l.b16 %v77
    %v152 = vunpack.c.h.b16 %v77
    %v153 = vunpack.c.l.b16 %v78
    %v154 = vunpack.c.h.b16 %v78
    %v155 = vunpack.c.l.b16 %v79
    %v156 = vunpack.c.h.b16 %v79
    %v157 = vunpack.c.l.b16 %v80
    %v158 = vunpack.c.h.b16 %v80
    %v159 = vpack.c.b16 %v151, %v151
    %v160 = vpack.c.b16 %v152, %v152
    %v161 = vpack.c.b16 %v153, %v153
    %v162 = vpack.c.b16 %v154, %v154
    %v163 = vpack.c.b16 %v155, %v155
    %v164 = vpack.c.b16 %v156, %v156
    %v165 = vpack.c.b16 %v157, %v157
    %v166 = vpack.c.b16 %v158, %v158
    %v239 = vunpack.c.l.b16 %v81
    %v240 = vunpack.c.h.b16 %v81
    %v241 = vunpack.c.l.b16 %v82
    %v242 = vunpack.c.h.b16 %v82
    %v243 = vunpack.c.l.b16 %v83
    %v244 = vunpack.c.h.b16 %v83
    %v245 = vunpack.c.l.b16 %v84
    %v246 = vunpack.c.h.b16 %v84
    %v247 = vunpack.c.l.b16 %v85
    %v248 = vunpack.c.h.b16 %v85
    %v249 = vunpack.c.l.b16 %v86
    %v250 = vunpack.c.h.b16 %v86
    %v251 = vunpack.c.l.b16 %v87
    %v252 = vunpack.c.h.b16 %v87
    %v253 = vunpack.c.l.b16 %v88
    %v254 = vunpack.c.h.b16 %v88
    %v255 = vunpack.c.l.b16 %v89
    %v256 = vunpack.c.h.b16 %v89
    %v257 = vunpack.c.l.b16 %v90
    %v258 = vunpack.c.h.b16 %v90
    %v259 = vunpack.c.l.b16 %v91
    %v260 = vunpack.c.h.b16 %v91
    %v261 = vunpack.c.l.b16 %v92
    %v262 = vunpack.c.h.b16 %v92
    %v263 = vunpack.c.l.b16 %v93
    %v264 = vunpack.c.h.b16 %v93
    %v265 = vunpack.c.l.b16 %v94
    %v266 = vunpack.c.h.b16 %v94
    %v267 = vunpack.c.l.b16 %v95
    %v268 = vunpack.c.h.b16 %v95
    %v269 = vunpack.c.l.b16 %v96
    %v270 = vunpack.c.h.b16 %v96
    %v271 = vunpack.c.l.b16 %v97
    %v272 = vunpack.c.h.b16 %v97
    %v273 = vunpack.c.l.b16 %v98
    %v274 = vunpack.c.h.b16 %v98
    %v275 = vunpack.c.l.b16 %v99
    %v276 = vunpack.c.h.b16 %v99
    %v277 = vunpack.c.l.b16 %v100
    %v278 = vunpack.c.h.b16 %v100
    %v279 = vunpack.c.l.b16 %v101
    %v280 = vunpack.c.h.b16 %v101
    %v281 = vunpack.c.l.b16 %v102
    %v282 = vunpack.c.h.b16 %v102
    %v283 = vunpack.c.l.b16 %v103
    %v284 = vunpack.c.h.b16 %v103
    %v285 = vunpack.c.l.b16 %v104
    %v286 = vunpack.c.h.b16 %v104
    %v287 = vunpack.c.l.b16 %v105
    %v288 = vunpack.c.h.b16 %v105
    %v289 = vunpack.c.l.b16 %v106
    %v290 = vunpack.c.h.b16 %v106
    %v291 = vunpack.c.l.b16 %v107
    %v292 = vunpack.c.h.b16 %v107
    %v293 = vunpack.c.l.b16 %v108
    %v294 = vunpack.c.h.b16 %v108
    %v295 = vunpack.c.l.b16 %v109
    %v296 = vunpack.c.h.b16 %v109
    %v297 = vunpack.c.l.b16 %v110
    %v298 = vunpack.c.h.b16 %v110
    %v299 = vunpack.c.l.b16 %v111
    %v300 = vunpack.c.h.b16 %v111
    %v301 = vunpack.c.l.b16 %v112
    %v302 = vunpack.c.h.b16 %v112
    %v303 = vunpack.c.l.b16 %v113
    %v304 = vunpack.c.h.b16 %v113
    %v305 = vunpack.c.l.b16 %v114
    %v306 = vunpack.c.h.b16 %v114
    %v307 = vunpack.c.l.b16 %v115
    %v308 = vunpack.c.h.b16 %v115
    %v309 = vunpack.c.l.b16 %v116
    %v310 = vunpack.c.h.b16 %v116
    %v311 = vunpack.c.l.b16 %v117
    %v312 = vunpack.c.h.b16 %v117
    %v313 = vunpack.c.l.b16 %v118
    %v314 = vunpack.c.h.b16 %v118
    %v315 = vunpack.c.l.b16 %v119
    %v316 = vunpack.c.h.b16 %v119
    %v317 = vunpack.c.l.b16 %v120
    %v318 = vunpack.c.h.b16 %v120
    %v319 = vunpack.c.l.b16 %v121
    %v320 = vunpack.c.h.b16 %v121
    %v321 = vunpack.c.l.b16 %v122
    %v322 = vunpack.c.h.b16 %v122
    %v323 = vunpack.c.l.b16 %v123
    %v324 = vunpack.c.h.b16 %v123
    %v325 = vunpack.c.l.b16 %v124
    %v326 = vunpack.c.h.b16 %v124
    %v327 = vunpack.c.l.b16 %v125
    %v328 = vunpack.c.h.b16 %v125
    %v329 = vunpack.c.l.b16 %v126
    %v330 = vunpack.c.h.b16 %v126
    %v331 = vunpack.c.l.b16 %v127
    %v332 = vunpack.c.h.b16 %v127
    %v333 = vunpack.c.l.b16 %v128
    %v334 = vunpack.c.h.b16 %v128
    %v335 = vunpack.c.l.b16 %v129
    %v336 = vunpack.c.h.b16 %v129
    %v337 = vunpack.c.l.b16 %v130
    %v338 = vunpack.c.h.b16 %v130
    %v339 = vunpack.c.l.b16 %v131
    %v340 = vunpack.c.h.b16 %v131
    %v341 = vunpack.c.l.b16 %v132
    %v342 = vunpack.c.h.b16 %v132
    %v343 = vunpack.c.l.b16 %v133
    %v344 = vunpack.c.h.b16 %v133
    %v345 = vunpack.c.l.b16 %v134
    %v346 = vunpack.c.h.b16 %v134
    %v347 = vunpack.c.l.b16 %v135
    %v348 = vunpack.c.h.b16 %v135
    %v349 = vunpack.c.l.b16 %v136
    %v350 = vunpack.c.h.b16 %v136
    %v351 = vunpack.c.l.b16 %v137
    %v352 = vunpack.c.h.b16 %v137
    %v353 = vunpack.c.l.b16 %v138
    %v354 = vunpack.c.h.b16 %v138
    %v355 = vunpack.c.l.b16 %v139
    %v356 = vunpack.c.h.b16 %v139
    %v357 = vunpack.c.l.b16 %v140
    %v358 = vunpack.c.h.b16 %v140
    %v359 = vunpack.c.l.b16 %v141
    %v360 = vunpack.c.h.b16 %v141
    %v361 = vunpack.c.l.b16 %v142
    %v362 = vunpack.c.h.b16 %v142
    %v363 = vunpack.c.l.b16 %v143
    %v364 = vunpack.c.h.b16 %v143
    %v365 = vunpack.c.l.b16 %v144
    %v366 = vunpack.c.h.b16 %v144
    %v367 = vpack.c.b16 %v247, %v239
    %v368 = vpack.c.b16 %v248, %v240
    %v369 = vpack.c.b16 %v249, %v241
    %v370 = vpack.c.b16 %v250, %v242
    %v371 = vpack.c.b16 %v251, %v243
    %v372 = vpack.c.b16 %v252, %v244
    %v373 = vpack.c.b16 %v253, %v245
    %v374 = vpack.c.b16 %v254, %v246
    %v375 = vpack.c.b16 %v263, %v255
    %v376 = vpack.c.b16 %v264, %v256
    %v377 = vpack.c.b16 %v265, %v257
    %v378 = vpack.c.b16 %v266, %v258
    %v379 = vpack.c.b16 %v267, %v259
    %v380 = vpack.c.b16 %v268, %v260
    %v381 = vpack.c.b16 %v269, %v261
    %v382 = vpack.c.b16 %v270, %v262
    %v383 = vpack.c.b16 %v279, %v271
    %v384 = vpack.c.b16 %v280, %v272
    %v385 = vpack.c.b16 %v281, %v273
    %v386 = vpack.c.b16 %v282, %v274
    %v387 = vpack.c.b16 %v283, %v275
    %v388 = vpack.c.b16 %v284, %v276
    %v389 = vpack.c.b16 %v285, %v277
    %v390 = vpack.c.b16 %v286, %v278
    %v391 = vpack.c.b16 %v295, %v287
    %v392 = vpack.c.b16 %v296, %v288
    %v393 = vpack.c.b16 %v297, %v289
    %v394 = vpack.c.b16 %v298, %v290
    %v395 = vpack.c.b16 %v299, %v291
    %v396 = vpack.c.b16 %v300, %v292
    %v397 = vpack.c.b16 %v301, %v293
    %v398 = vpack.c.b16 %v302, %v294
    %v399 = vpack.c.b16 %v311, %v303
    %v400 = vpack.c.b16 %v312, %v304
    %v401 = vpack.c.b16 %v313, %v305
    %v402 = vpack.c.b16 %v314, %v306
    %v403 = vpack.c.b16 %v315, %v307
    %v404 = vpack.c.b16 %v316, %v308
    %v405 = vpack.c.b16 %v317, %v309
    %v406 = vpack.c.b16 %v318, %v310
    %v407 = vpack.c.b16 %v327, %v319
    %v408 = vpack.c.b16 %v328, %v320
    %v409 = vpack.c.b16 %v329, %v321
    %v410 = vpack.c.b16 %v330, %v322
    %v411 = vpack.c.b16 %v331, %v323
    %v412 = vpack.c.b16 %v332, %v324
    %v413 = vpack.c.b16 %v333, %v325
    %v414 = vpack.c.b16 %v334, %v326
    %v415 = vpack.c.b16 %v343, %v335
    %v416 = vpack.c.b16 %v344, %v336
    %v417 = vpack.c.b16 %v345, %v337
    %v418 = vpack.c.b16 %v346, %v338
    %v419 = vpack.c.b16 %v347, %v339
    %v420 = vpack.c.b16 %v348, %v340
    %v421 = vpack.c.b16 %v349, %v341
    %v422 = vpack.c.b16 %v350, %v342
    %v423 = vpack.c.b16 %v359, %v351
    %v424 = vpack.c.b16 %v360, %v352
    %v425 = vpack.c.b16 %v361, %v353
    %v426 = vpack.c.b16 %v362, %v354
    %v427 = vpack.c.b16 %v363, %v355
    %v428 = vpack.c.b16 %v364, %v356
    %v429 = vpack.c.b16 %v365, %v357
    %v430 = vpack.c.b16 %v366, %v358
    %495 = vmatpush.bf16.xpose.msra.mxu0 %v423
    %496 = vmatpush.bf16.xpose.msra.mxu0 %v415
    %497 = vmatpush.bf16.xpose.msra.mxu0 %v407
    %498 = vmatpush.bf16.xpose.msra.mxu0 %v399
    %499 = vmatpush.bf16.xpose.msra.mxu0 %v391
    %500 = vmatpush.bf16.xpose.msra.mxu0 %v383
    %501 = vmatpush.bf16.xpose.msra.mxu0 %v375
    %502 = vmatpush.bf16.xpose.msra.mxu0 %v367
    %503 = vmatmul.bf16.gmra.mxu0 %v159
    %v504 = vpop.f32.mrf.mxu0
    %v505 = vadd.f32 %v146, %v504
    %v506 = vpop.f32.mrf.mxu0
    %507 = vdwg.mxu0
    %508 = vmatpush.bf16.xpose.msra.mxu0 %v424
    %509 = vmatpush.bf16.xpose.msra.mxu0 %v416
    %510 = vmatpush.bf16.xpose.msra.mxu0 %v408
    %511 = vmatpush.bf16.xpose.msra.mxu0 %v400
    %512 = vmatpush.bf16.xpose.msra.mxu0 %v392
    %513 = vmatpush.bf16.xpose.msra.mxu0 %v384
    %514 = vmatpush.bf16.xpose.msra.mxu0 %v376
    %515 = vmatpush.bf16.xpose.msra.mxu0 %v368
    %516 = vmatmul.bf16.gmra.mxu0 %v160
    %v517 = vpop.f32.mrf.mxu0
    %v518 = vadd.f32 %v505, %v517
    %v519 = vpop.f32.mrf.mxu0
    %520 = vdwg.mxu0
    %521 = vmatpush.bf16.xpose.msra.mxu0 %v425
    %522 = vmatpush.bf16.xpose.msra.mxu0 %v417
    %523 = vmatpush.bf16.xpose.msra.mxu0 %v409
    %524 = vmatpush.bf16.xpose.msra.mxu0 %v401
    %525 = vmatpush.bf16.xpose.msra.mxu0 %v393
    %526 = vmatpush.bf16.xpose.msra.mxu0 %v385
    %527 = vmatpush.bf16.xpose.msra.mxu0 %v377
    %528 = vmatpush.bf16.xpose.msra.mxu0 %v369
    %529 = vmatmul.bf16.gmra.mxu0 %v161
    %v530 = vpop.f32.mrf.mxu0
    %v531 = vadd.f32 %v518, %v530
    %v532 = vpop.f32.mrf.mxu0
    %533 = vdwg.mxu0
    %534 = vmatpush.bf16.xpose.msra.mxu0 %v426
    %535 = vmatpush.bf16.xpose.msra.mxu0 %v418
    %536 = vmatpush.bf16.xpose.msra.mxu0 %v410
    %537 = vmatpush.bf16.xpose.msra.mxu0 %v402
    %538 = vmatpush.bf16.xpose.msra.mxu0 %v394
    %539 = vmatpush.bf16.xpose.msra.mxu0 %v386
    %540 = vmatpush.bf16.xpose.msra.mxu0 %v378
    %541 = vmatpush.bf16.xpose.msra.mxu0 %v370
    %542 = vmatmul.bf16.gmra.mxu0 %v162
    %v543 = vpop.f32.mrf.mxu0
    %v544 = vadd.f32 %v531, %v543
    %v545 = vpop.f32.mrf.mxu0
    %546 = vdwg.mxu0
    %547 = vmatpush.bf16.xpose.msra.mxu0 %v427
    %548 = vmatpush.bf16.xpose.msra.mxu0 %v419
    %549 = vmatpush.bf16.xpose.msra.mxu0 %v411
    %550 = vmatpush.bf16.xpose.msra.mxu0 %v403
    %551 = vmatpush.bf16.xpose.msra.mxu0 %v395
    %552 = vmatpush.bf16.xpose.msra.mxu0 %v387
    %553 = vmatpush.bf16.xpose.msra.mxu0 %v379
    %554 = vmatpush.bf16.xpose.msra.mxu0 %v371
    %555 = vmatmul.bf16.gmra.mxu0 %v163
    %v556 = vpop.f32.mrf.mxu0
    %v557 = vadd.f32 %v544, %v556
    %v558 = vpop.f32.mrf.mxu0
    %559 = vdwg.mxu0
    %560 = vmatpush.bf16.xpose.msra.mxu0 %v428
    %561 = vmatpush.bf16.xpose.msra.mxu0 %v420
    %562 = vmatpush.bf16.xpose.msra.mxu0 %v412
    %563 = vmatpush.bf16.xpose.msra.mxu0 %v404
    %564 = vmatpush.bf16.xpose.msra.mxu0 %v396
    %565 = vmatpush.bf16.xpose.msra.mxu0 %v388
    %566 = vmatpush.bf16.xpose.msra.mxu0 %v380
    %567 = vmatpush.bf16.xpose.msra.mxu0 %v372
    %568 = vmatmul.bf16.gmra.mxu0 %v164
    %v569 = vpop.f32.mrf.mxu0
    %v570 = vadd.f32 %v557, %v569
    %v571 = vpop.f32.mrf.mxu0
    %572 = vdwg.mxu0
    %573 = vmatpush.bf16.xpose.msra.mxu0 %v429
    %574 = vmatpush.bf16.xpose.msra.mxu0 %v421
    %575 = vmatpush.bf16.xpose.msra.mxu0 %v413
    %576 = vmatpush.bf16.xpose.msra.mxu0 %v405
    %577 = vmatpush.bf16.xpose.msra.mxu0 %v397
    %578 = vmatpush.bf16.xpose.msra.mxu0 %v389
    %579 = vmatpush.bf16.xpose.msra.mxu0 %v381
    %580 = vmatpush.bf16.xpose.msra.mxu0 %v373
    %581 = vmatmul.bf16.gmra.mxu0 %v165
    %v582 = vpop.f32.mrf.mxu0
    %v583 = vadd.f32 %v570, %v582
    %v584 = vpop.f32.mrf.mxu0
    %585 = vdwg.mxu0
    %586 = vmatpush.bf16.xpose.msra.mxu0 %v430
    %587 = vmatpush.bf16.xpose.msra.mxu0 %v422
    %588 = vmatpush.bf16.xpose.msra.mxu0 %v414
    %589 = vmatpush.bf16.xpose.msra.mxu0 %v406
    %590 = vmatpush.bf16.xpose.msra.mxu0 %v398
    %591 = vmatpush.bf16.xpose.msra.mxu0 %v390
    %592 = vmatpush.bf16.xpose.msra.mxu0 %v382
    %593 = vmatpush.bf16.xpose.msra.mxu0 %v374
    %594 = vmatmul.bf16.gmra.mxu0 %v166
    %v595 = vpop.f32.mrf.mxu0
    %v596 = vadd.f32 %v583, %v595
    %v597 = vpop.f32.mrf.mxu0
    %598 = vdwg.mxu0
    %v599 = vmax.f32 %v596, 0.0
    %v600 = vpack.c.bf16 %v599, %v599
    %v601 = vld [vmem:[#allocation8] sm:$0xf]
    %v602 = vld [vmem:[#allocation8 + $0x4] sm:$0xf]
    %v603 = vld [vmem:[#allocation8 + $0x8] sm:$0xf]
    %v604 = vld [vmem:[#allocation8 + $0xc] sm:$0xf]
    %v605 = vld [vmem:[#allocation8 + $0x10] sm:$0xf]
    %v606 = vld [vmem:[#allocation8 + $0x14] sm:$0xf]
    %v607 = vld [vmem:[#allocation8 + $0x18] sm:$0xf]
    %v608 = vld [vmem:[#allocation8 + $0x1c] sm:$0xf]
    %v609 = vld [vmem:[#allocation8 + $0x20] sm:$0xf]
    %v610 = vld [vmem:[#allocation8 + $0x24] sm:$0xf]
    %v611 = vld [vmem:[#allocation8 + $0x28] sm:$0xf]
    %v612 = vld [vmem:[#allocation8 + $0x2c] sm:$0xf]
    %v613 = vld [vmem:[#allocation8 + $0x30] sm:$0xf]
    %v614 = vld [vmem:[#allocation8 + $0x34] sm:$0xf]
    %v615 = vld [vmem:[#allocation8 + $0x38] sm:$0xf]
    %v616 = vld [vmem:[#allocation8 + $0x3c] sm:$0xf]
    %v617 = vperm.slane %v145, 1
    %v634 = vunpack.c.l.b16 %v601
    %v635 = vunpack.c.l.b16 %v602
    %v636 = vunpack.c.l.b16 %v603
    %v637 = vunpack.c.l.b16 %v604
    %v638 = vunpack.c.l.b16 %v605
    %v639 = vunpack.c.l.b16 %v606
    %v640 = vunpack.c.l.b16 %v607
    %v641 = vunpack.c.l.b16 %v608
    %v642 = vunpack.c.l.b16 %v609
    %v643 = vunpack.c.l.b16 %v610
    %v644 = vunpack.c.l.b16 %v611
    %v645 = vunpack.c.l.b16 %v612
    %v646 = vunpack.c.l.b16 %v613
    %v647 = vunpack.c.l.b16 %v614
    %v648 = vunpack.c.l.b16 %v615
    %v649 = vunpack.c.l.b16 %v616
    %v650 = vpack.c.b16 %v635, %v634
    %v651 = vpack.c.b16 %v637, %v636
    %v652 = vpack.c.b16 %v639, %v638
    %v653 = vpack.c.b16 %v641, %v640
    %v654 = vpack.c.b16 %v643, %v642
    %v655 = vpack.c.b16 %v645, %v644
    %v656 = vpack.c.b16 %v647, %v646
    %v657 = vpack.c.b16 %v649, %v648
    %666 = vmatpush.bf16.msra.mxu0 %v657
    %667 = vmatpush.bf16.msra.mxu0 %v656
    %668 = vmatpush.bf16.msra.mxu0 %v655
    %669 = vmatpush.bf16.msra.mxu0 %v654
    %670 = vmatpush.bf16.msra.mxu0 %v653
    %671 = vmatpush.bf16.msra.mxu0 %v652
    %672 = vmatpush.bf16.msra.mxu0 %v651
    %673 = vmatpush.bf16.msra.mxu0 %v650
    %674 = vmatmul.bf16.gmra.mxu0 %v600
    %v675 = vpop.f32.mrf.mxu0
    %v676 = vadd.f32 %v617, %v675
    %v677 = vpop.f32.mrf.mxu0
    %678 = vdwg.mxu0
    %v679 = vxor.u32 %v676, 2147483648
    %v680 = vmul.f32 %v679, 1.442695
    %v681 = vpow.pop %v680
    %v682 = vadd.f32 %v681, 1.0
    %v683 = vrcp.pop %v682
    %v684 = vmul.f32 %v682, %v683
    %v685 = vsub.f32 1.0, %v684
    %v686 = vmul.f32 %v683, %v685
    %v687 = vadd.f32 %v683, %v686
    %vm688 = vweird.f32 %v682
    %vm689 = vweird.f32 %v683
    %vm690 = vmor %vm688, %vm689
    %v691 = vsel %vm690, %v683, %v687
    %v692 = vand.u32 2147483647, %v682
    %vm693 = vcmp.eq.f32.partialorder %v692, 8.507059e+37
    %v694 = vand.u32 %v682, 2147483648
    %v695 = vor.u32 1.1754944e-38, %v694
    %v696 = vsel %vm693, %v695, %v691
    %v697 = vmul.f32 1.0, %v696
    %698 = vst [vmem:[#allocation10] sm:$0xff] %v697
    // Predicated region
    $region34: #{tpu_custom_call.1} parent=1 // pred_check
      _
    $region35: #{tpu_custom_call.1} parent=1 // pred_check_branch
      %700 = sbr.rel (0) target = $region37
    $region36: #{tpu_custom_call.1} parent=1 // pred_region
      %702 = vsyncadd [#allocation4], 0
      %s704 = sshll.u32 [#allocation10], 4
      %s705 = int_to_ptr.vmem [resolvable:$true] %s704
      %s706 = sshll.u32 %s4, 4
      %s707 = int_to_ptr.hbm [resolvable:$true] %s706
      %709 = dma.vmem_to_hbm [thread:$0]  %s705, 128, %s707, [#allocation4]
    $region37: #{tpu_custom_call.1} parent=1 // pred_fallthru
      _
    // Predicated region
    $region38: #{tpu_custom_call.1} parent=1 // pred_check
      _
    $region39: #{tpu_custom_call.1} parent=1 // pred_check_branch
      %711 = sbr.rel (0) target = $region41
    $region40: #{tpu_custom_call.1} parent=1 // pred_region
      %713 = dma.done [#allocation4], 128
    $region41: #{tpu_custom_call.1} parent=1 // pred_fallthru
      _
    %714 = vsyncpa [#allocation3], 1
    %715 = vsyncpa [#allocation6], 1
    %716 = vsyncpa [#allocation9], 1
    %717 = vsyncpa [#allocation4], 1

</llo_original>
